<compile_context>
chip_gen: v7x
topology: tpu7x:2x2x1
jax: 0.10.0
libtpu: 0.0.40
codegen_flags: <defaults>
</compile_context>

<pallas_src>
import functools

import jax
import jax.numpy as jnp
from jax.experimental import pallas as pl
from jax.experimental.pallas import tpu as pltpu


def _round_up(x, m):
    return ((x + m - 1) // m) * m


def project_kernel(h_ref, w_ref, z_ref):
    """One dst-row tile of the hoisted fused projection: [TM, in_dim] @ [in_dim, Ppad]."""
    z_ref[...] = jnp.dot(h_ref[...], w_ref[...], preferred_element_type=jnp.float32)


def attn_kernel(el_ref, er_ref, adj_ref, zbig_ref, expand_ref, out_ref, *,
                num_heads, out_dim):
    """One dst-row tile: masked softmax over incoming edges + fused aggregation.

    el_ref     : [8, Np]       f32   src attention logits, head on the sublane axis
    er_ref     : [TM, H]       f32   dst attention logits for this tile
    adj_ref    : [TM, Np]      int8  adjacency tile, adj[dst, src] != 0 where edge exists
    zbig_ref   : [H*Np, OUTP]  bf16  block-diagonal src features + per-head ones column
    expand_ref : [H, OUTP]     f32   expand[h, h*D:(h+1)*D] = 1 (denominator broadcast)
    out_ref    : [TM, OUTP]    f32   heads in the first H*D lanes, rest zero
    """
    H, D = num_heads, out_dim
    HD = H * D

    mask = adj_ref[...].astype(jnp.float32) > 0.0      # [TM, Np] incoming-edge mask
    el = el_ref[...]                                    # [8, Np]
    er = er_ref[...]                                    # [TM, H]
    neg_inf = jnp.float32(-1e30)

    ps = []
    for head in range(H):                               # static unroll, H is small
        # e[dst, src] = leaky_relu(attn_fc([z_src, z_dst])) = leaky_relu(el[src] + er[dst]);
        # el row is already a lane vector -> sublane broadcast only.
        e = el[head:head + 1, :] + er[:, head:head + 1]            # [TM, Np]
        e = jnp.where(e > 0.0, e, 0.01 * e)                        # F.leaky_relu slope .01
        e = jnp.where(mask, e, neg_inf)                            # mailbox softmax mask
        e_max = jnp.max(e, axis=1, keepdims=True)
        # exp(-1e30 - e_max) underflows to exactly 0, so no post-exp mask is needed.
        ps.append(jnp.exp(e - e_max).astype(jnp.bfloat16))

    p_big = jnp.concatenate(ps, axis=1)                            # [TM, H*Np] bf16
    # One fused MXU matmul: per-head aggregation in lanes [h*D, (h+1)*D) and the softmax
    # denominators (ones column per head in zbig) in lanes [HD, HD+H).
    res = jnp.dot(p_big, zbig_ref[...], preferred_element_type=jnp.float32)  # [TM, OUTP]

    denom = jnp.maximum(res[:, HD:HD + H], 1e-30)                  # zero-in-degree guard
    recip = pl.reciprocal(denom, approx=True)                      # EUP, [TM, H]
    # Broadcast each head's 1/denom across its D output lanes (and zero the tail and the
    # denominator lanes) via a tiny MXU matmul -> single unmasked lane-dense store.
    factor = jnp.dot(recip, expand_ref[...], preferred_element_type=jnp.float32)
    out_ref[...] = res * factor


def cgat_forward(h, fc_weight, attn_weight, adj, *, num_heads, out_dim, tile_m=512):
    """CGATLayer forward.

    h:           [N, in_dim]                   constituent-node features
    fc_weight:   [num_heads*out_dim, in_dim]   (PyTorch nn.Linear layout)
    attn_weight: [1, 2*out_dim]                (attn_fc, shared across heads)
    adj:         [N, N]  adj[dst, src] != 0 if edge src->dst (cc type + self edges)
    returns:     [N, num_heads, out_dim]
    """
    N, in_dim = h.shape
    H, D = num_heads, out_dim
    HD = H * D

    # Fold attn_fc into the fc projection: z_h @ a_src == h @ (W_h.T @ a_src), so one
    # matmul against W_big = [fc.T | per-head fc.T@a_src | per-head fc.T@a_dst] yields
    # z, el and er in a single slab.
    w_t = fc_weight.T.astype(jnp.float32)                          # [in_dim, HD]
    a_src = attn_weight[0, :D].astype(jnp.float32)
    a_dst = attn_weight[0, D:].astype(jnp.float32)
    w_hd = w_t.reshape(in_dim, H, D)
    w_big = jnp.concatenate([w_t, w_hd @ a_src, w_hd @ a_dst], axis=1)  # [in_dim, HD+2H]

    p_cols = HD + 2 * H
    p_pad = _round_up(p_cols, 128)          # lane-dense fused-projection width
    out_pad = _round_up(HD + H, 128)        # lane-dense aggregation/output width

    # dst-row tile: large enough to amortize per-step overhead, multiple of 32 so the
    # int8 adjacency tile is layout-native, clamped for small graphs.
    tm = _round_up(min(int(tile_m), _round_up(max(N, 1), 32)), 32)
    n_pad = _round_up(N, tm)
    steps = n_pad // tm

    h_p = jnp.zeros((n_pad, in_dim), jnp.float32).at[:N, :].set(h.astype(jnp.float32))
    w_p = jnp.zeros((in_dim, p_pad), jnp.float32).at[:, :p_cols].set(w_big)
    adj_p = jnp.zeros((n_pad, n_pad), jnp.int8).at[:N, :N].set((adj > 0).astype(jnp.int8))

    # ---- hoisted projection: runs ONCE (f32 so the attention logits stay f32) ----------
    zfull = pl.pallas_call(
        project_kernel,
        out_shape=jax.ShapeDtypeStruct((n_pad, p_pad), jnp.float32),
        grid=(steps,),
        in_specs=[
            pl.BlockSpec((tm, in_dim), lambda i: (i, 0)),
            pl.BlockSpec((in_dim, p_pad), lambda i: (0, 0)),
        ],
        out_specs=pl.BlockSpec((tm, p_pad), lambda i: (i, 0)),
        compiler_params=pltpu.CompilerParams(dimension_semantics=("parallel",)),
        cost_estimate=pl.CostEstimate(
            flops=int(2 * n_pad * in_dim * p_pad),
            transcendentals=0,
            bytes_accessed=int(h_p.size * 4 + w_p.size * 4 + n_pad * p_pad * 4)),
    )(h_p, w_p)

    z = zfull[:, :HD]                        # [n_pad, HD]  f32 per-head features
    el = zfull[:, HD:HD + H]                 # [n_pad, H]   f32 src logits
    er = zfull[:, HD + H:HD + 2 * H]         # [n_pad, H]   f32 dst logits

    # Src logits with src on the lane axis (head on sublanes) for cheap broadcast.
    el_t = jnp.zeros((8, n_pad), jnp.float32).at[:H, :].set(el.T)

    # Block-diagonal bf16 src-feature matrix + a ones column per head so the fused
    # aggregation matmul also produces the softmax denominators on the MXU.
    z3 = z.reshape(n_pad, H, D)
    zbig = jnp.zeros((H * n_pad, out_pad), jnp.bfloat16)
    for hh in range(H):
        zbig = zbig.at[hh * n_pad:(hh + 1) * n_pad, hh * D:(hh + 1) * D].set(
            z3[:, hh, :].astype(jnp.bfloat16))
        zbig = zbig.at[hh * n_pad:(hh + 1) * n_pad, HD + hh].set(1.0)

    expand = jnp.zeros((H, out_pad), jnp.float32)
    for hh in range(H):
        expand = expand.at[hh, hh * D:(hh + 1) * D].set(1.0)

    # ---- VMEM budget / cost model -------------------------------------------------------
    resident = (8 * n_pad * 4                 # el
                + H * n_pad * out_pad * 2     # zbig (block-diagonal, bf16)
                + H * out_pad * 4)            # expand
    per_tile = (tm * n_pad * 1                # adj tile (int8)
                + tm * H * 4                  # er tile
                + tm * out_pad * 4)           # out tile
    needed = 2 * (resident + per_tile)        # conservative: everything double-buffered
    vmem_limit = int(min(96 * 2 ** 20, 2 * needed + 16 * 2 ** 20))

    cost = pl.CostEstimate(
        flops=int(2 * n_pad * (H * n_pad) * out_pad      # fused aggregation matmul
                  + 2 * n_pad * H * out_pad              # denominator-broadcast matmul
                  + 7 * H * n_pad * n_pad),              # softmax elementwise
        transcendentals=int(H * n_pad * n_pad + H * n_pad),
        bytes_accessed=int(adj_p.size + zbig.size * 2 + el_t.size * 4 + er.size * 4
                           + expand.size * 4 + n_pad * out_pad * 4),
    )

    kernel = functools.partial(attn_kernel, num_heads=H, out_dim=D)
    out = pl.pallas_call(
        kernel,
        out_shape=jax.ShapeDtypeStruct((n_pad, out_pad), jnp.float32),
        grid=(steps,),
        in_specs=[
            pl.BlockSpec((8, n_pad), lambda i: (0, 0)),            # el (resident)
            pl.BlockSpec((tm, H), lambda i: (i, 0)),               # er dst tile
            pl.BlockSpec((tm, n_pad), lambda i: (i, 0)),           # adj dst tile (int8)
            pl.BlockSpec((H * n_pad, out_pad), lambda i: (0, 0)),  # zbig (resident)
            pl.BlockSpec((H, out_pad), lambda i: (0, 0)),          # expand (resident)
        ],
        out_specs=pl.BlockSpec((tm, out_pad), lambda i: (i, 0)),
        compiler_params=pltpu.CompilerParams(
            dimension_semantics=("parallel",),
            vmem_limit_bytes=vmem_limit),
        cost_estimate=cost,
    )(el_t, er, adj_p, zbig, expand)

    return out[:N, :HD].reshape(N, H, D)


def cgat_reference(h, fc_weight, attn_weight, adj, *, num_heads, out_dim):
    """Pure-JAX f32 reference mirroring the PyTorch/DGL forward."""
    N = h.shape[0]
    H, D = num_heads, out_dim
    z = (h @ fc_weight.T).reshape(N, H, D)
    a_s = attn_weight[0, :D]
    a_d = attn_weight[0, D:]
    el = jnp.einsum('nhd,d->nh', z, a_s)
    er = jnp.einsum('nhd,d->nh', z, a_d)
    e = el[None, :, :] + er[:, None, :]                 # [dst, src, head]
    e = jnp.where(e > 0, e, 0.01 * e)
    m = adj[:, :, None] > 0
    e = jnp.where(m, e, -1e30)
    p = jnp.where(m, jnp.exp(e - e.max(axis=1, keepdims=True)), 0.0)
    alpha = p / p.sum(axis=1, keepdims=True)
    return jnp.einsum('ijh,jhd->ihd', alpha, z)


if __name__ == "__main__":
    # Small shapes consistent with the module: N constituent nodes, in_dim features.
    # NOTE: for production, batch many small graphs into one call (block-diagonal adj)
    # so the MXU M-dimension is >= 256 and per-call overhead is amortized.
    N, in_dim, out_dim, num_heads = 16, 32, 8, 4

    key = jax.random.PRNGKey(0)
    k_fc, k_attn, k_h, k_adj = jax.random.split(key, 4)

    # Deterministic xavier_normal_ with gain = calculate_gain('relu') = sqrt(2).
    gain = jnp.sqrt(2.0)
    fan_out_fc, fan_in_fc = out_dim * num_heads, in_dim
    std_fc = gain * jnp.sqrt(2.0 / (fan_in_fc + fan_out_fc))
    fc_weight = jax.random.normal(k_fc, (fan_out_fc, fan_in_fc), jnp.float32) * std_fc

    std_attn = gain * jnp.sqrt(2.0 / (2 * out_dim + 1))
    attn_weight = jax.random.normal(k_attn, (1, 2 * out_dim), jnp.float32) * std_attn

    # Constituent-node features.
    h = jax.random.normal(k_h, (N, in_dim), jnp.float32)

    # Dense adjacency for the selected cc edge type; self edges (dtype==4) on the
    # diagonal so every node has >= 1 incoming edge (as in the DGL graph).
    adj = (jax.random.uniform(k_adj, (N, N)) < 0.3).astype(jnp.float32)
    adj = jnp.maximum(adj, jnp.eye(N, dtype=jnp.float32))

    out = cgat_forward(h, fc_weight, attn_weight, adj,
                       num_heads=num_heads, out_dim=out_dim)
    out = jax.block_until_ready(out)

    ref = cgat_reference(h, fc_weight, attn_weight, adj,
                         num_heads=num_heads, out_dim=out_dim)
    max_err = float(jnp.max(jnp.abs(out - ref)))
    assert out.shape == (N, num_heads, out_dim), out.shape
    # Aggregation uses bf16 MXU operands (f32 accumulation, f32 logits/softmax math);
    # compare against the pure-f32 reference with a bf16-appropriate tolerance.
    assert jnp.allclose(out, ref, atol=5e-2, rtol=5e-2), f"max_err={max_err}"

    print("KERNEL_OK")
</pallas_src>

<mosaic_0001>
module attributes {stable_mosaic.version = 11 : i64} {
  func.func @project_kernel(%arg0: i32, %arg1: memref<32x32xf32, #tpu.memory_space<vmem>>, %arg2: memref<32x128xf32, #tpu.memory_space<vmem>>, %arg3: memref<32x128xf32, #tpu.memory_space<vmem>>) attributes {dimension_semantics = [#tpu.dimension_semantics<parallel>], iteration_bounds = array<i64: 1>, scalar_prefetch = 0 : i64, scratch_operands = 0 : i64, tpu.core_type = #tpu.core_type<tc>, window_params = [{transform_indices = @transform_0, window_bounds = array<i64: 32, 32>}, {pipeline_mode = #tpu.pipeline_mode<synchronous>, transform_indices = @transform_1, window_bounds = array<i64: 32, 128>}, {transform_indices = @transform_2, window_bounds = array<i64: 32, 128>}]} {
    %c0 = arith.constant 0 : index
    %c0_0 = arith.constant 0 : index
    %0 = vector.load %arg1[%c0, %c0_0] : memref<32x32xf32, #tpu.memory_space<vmem>>, vector<32x32xf32>
    %c0_1 = arith.constant 0 : index
    %c0_2 = arith.constant 0 : index
    %1 = vector.load %arg2[%c0_1, %c0_2] : memref<32x128xf32, #tpu.memory_space<vmem>>, vector<32x128xf32>
    %cst = arith.constant dense<0.000000e+00> : vector<32x128xf32>
    %2 = tpu.matmul %0, %1, %cst {dimension_numbers = #tpu.dot_dimension_numbers<[1], [0], [0], [1], [0, 0, 1, 1], [], []>} : vector<32x32xf32>, vector<32x128xf32>, vector<32x128xf32> -> vector<32x128xf32>
    %c0_3 = arith.constant 0 : index
    %c0_4 = arith.constant 0 : index
    %3 = vector.load %arg3[%c0_3, %c0_4] : memref<32x128xf32, #tpu.memory_space<vmem>>, vector<32x128xf32>
    tpu.vector_store %arg3[%c0_3, %c0_4], %2 {strides = array<i32>} : memref<32x128xf32, #tpu.memory_space<vmem>>, vector<32x128xf32>,
    return
  }
  func.func @transform_0(%arg0: i32) -> (i32, i32) {
    %c0_i32 = arith.constant 0 : i32
    %c0_i32_0 = arith.constant 0 : i32
    return %arg0, %c0_i32 : i32, i32
  }
  func.func @transform_1(%arg0: i32) -> (i32, i32) {
    %c0_i32 = arith.constant 0 : i32
    %c0_i32_0 = arith.constant 0 : i32
    %c0_i32_1 = arith.constant 0 : i32
    return %c0_i32, %c0_i32_0 : i32, i32
  }
  func.func @transform_2(%arg0: i32) -> (i32, i32) {
    %c0_i32 = arith.constant 0 : i32
    %c0_i32_0 = arith.constant 0 : i32
    return %arg0, %c0_i32 : i32, i32
  }
}

</mosaic_0001>

<llo_original>
// kernel: tpu_custom_call.1
$region0: #{tpu_custom_call.1}
  #allocation0 [shape = 'u32[]', space=smem, size = 0x4, offset = 0x4, fixed_abs, tag = 'smem constant byte address 0x4 - core index']
  #allocation1 [shape = 'u32[144,128]{1,0:T(1,128)}', space=vmem, size = 0x12000, scoped, tag = 'internal scratch']
  %s0 = inlined_call_operand.hbm [shape: f32[32,32], index: 0, kind: input, shape index: {}]
  %s1 = inlined_call_operand.hbm [shape: f32[32,128], index: 1, kind: input, shape index: {}]
  %s2 = inlined_call_operand.hbm [shape: f32[32,128], index: 2, kind: output, shape index: {}]
  %s3 = sld [smem:[#allocation0]]
  $region26: #{tpu_custom_call.1} parent=0
    _
  %s5 = ssub.s32 1, %s3
  %s6 = scalar_select 0, %s5, %s3
  $region1: #{tpu_custom_call.1} parent=0
    #allocation2 [shape = 'u8[16384]{0}', space=vmem, size = 0x4000, scoped, tag = 'input window, operand 0, single buffered']
    #allocation3 [shape = 's32[1]{0}', space=sflag, size = 0x4, scoped, tag = 'scoped memory for tpu_custom_call.1']
    #allocation4 [shape = 's32[1]{0}', space=sflag, size = 0x4, scoped, tag = 'scoped memory for tpu_custom_call.1']
    #allocation5 [shape = 'u8[16384]{0}', space=vmem, size = 0x4000, scoped, tag = 'input window, operand 1, single buffered']
    #allocation6 [shape = 's32[1]{0}', space=sflag, size = 0x4, scoped, tag = 'scoped memory for tpu_custom_call.1']
    #allocation7 [shape = 'u8[16384]{0}', space=vmem, size = 0x4000, scoped, tag = 'output window, operand 0, single buffered']
    %7 = vsyncpa [#allocation3], 0
    %8 = vsyncpa [#allocation6], 0
    %9 = vsyncpa [#allocation4], 0
    // Predicated region
    $region2: #{tpu_custom_call.1} parent=1 // pred_check
      _
    $region3: #{tpu_custom_call.1} parent=1 // pred_check_branch
      %11 = sbr.rel (0) target = $region5
    $region4: #{tpu_custom_call.1} parent=1 // pred_region
      %s13 = ssub.s32 512, 512
      %14 = vsyncadd [#allocation3], %s13
      %s15 = sshll.u32 [#allocation2], 4
      %s16 = int_to_ptr.vmem [resolvable:$true] %s15
      %21 = dma.hbm_to_vmem [thread:$0]  %s0, 512, %s16, [#allocation3], 128, 128, 8
    $region5: #{tpu_custom_call.1} parent=1 // pred_fallthru
      _
    // Predicated region
    $region6: #{tpu_custom_call.1} parent=1 // pred_check
      _
    $region7: #{tpu_custom_call.1} parent=1 // pred_check_branch
      %23 = sbr.rel (0) target = $region9
    $region8: #{tpu_custom_call.1} parent=1 // pred_region
      %s25 = ssub.s32 512, 512
      %26 = vsyncadd [#allocation6], %s25
      %s27 = sshll.u32 [#allocation5], 4
      %s28 = int_to_ptr.vmem [resolvable:$true] %s27
      %33 = dma.hbm_to_vmem [thread:$0]  %s1, 512, %s28, [#allocation6], 128, 128, 8
    $region9: #{tpu_custom_call.1} parent=1 // pred_fallthru
      _
    // Predicated region
    $region10: #{tpu_custom_call.1} parent=1 // pred_check
      _
    $region11: #{tpu_custom_call.1} parent=1 // pred_check_branch
      %35 = sbr.rel (0) target = $region13
    $region12: #{tpu_custom_call.1} parent=1 // pred_region
      %36 = dma.done [#allocation3], 512
    $region13: #{tpu_custom_call.1} parent=1 // pred_fallthru
      _
    // Predicated region
    $region14: #{tpu_custom_call.1} parent=1 // pred_check
      _
    $region15: #{tpu_custom_call.1} parent=1 // pred_check_branch
      %38 = sbr.rel (0) target = $region17
    $region16: #{tpu_custom_call.1} parent=1 // pred_region
      %39 = dma.done [#allocation6], 512
    $region17: #{tpu_custom_call.1} parent=1 // pred_fallthru
      _
    %v40 = vld [vmem:[#allocation2] sm:$0xff]
    %v41 = vld [vmem:[#allocation2 + $0x8] sm:$0xff]
    %v42 = vld [vmem:[#allocation2 + $0x10] sm:$0xff]
    %v43 = vld [vmem:[#allocation2 + $0x18] sm:$0xff]
    %v44 = vld [vmem:[#allocation5] sm:$0xff]
    %v45 = vld [vmem:[#allocation5 + $0x8] sm:$0xff]
    %v46 = vld [vmem:[#allocation5 + $0x10] sm:$0xff]
    %v47 = vld [vmem:[#allocation5 + $0x18] sm:$0xff]
    %vm48 = vcmask 261120
    %v50 = vsel %vm48, %v40, 0
    %v53 = vsel %vm48, %v41, 0
    %v56 = vsel %vm48, %v42, 0
    %v59 = vsel %vm48, %v43, 0
    %61 = vmatprep.subr.mxu0 0.0
    %62 = vmatpush1.msra.mxu0 %v44
    %63 = vmatprep.subr.mxu0 0.0
    %64 = vmatpush1.msra.mxu0 %v45
    %65 = vmatprep.subr.mxu0 0.0
    %66 = vmatpush1.msra.mxu0 %v46
    %67 = vmatprep.subr.mxu0 0.0
    %68 = vmatpush1.msra.mxu0 %v47
    %69 = vmatprep.subr.mxu0 0.0
    %70 = vmatpush1.msra.mxu0 0.0
    %71 = vmatprep.subr.mxu0 0.0
    %72 = vmatpush1.msra.mxu0 0.0
    %73 = vmatprep.subr.mxu0 0.0
    %74 = vmatpush1.msra.mxu0 0.0
    %75 = vmatprep.subr.mxu0 0.0
    %76 = vmatpush1.msra.mxu0 0.0
    %77 = vmatprep.subr.mxu0 0.0
    %78 = vmatpush1.msra.mxu0 0.0
    %79 = vmatprep.subr.mxu0 0.0
    %80 = vmatpush1.msra.mxu0 0.0
    %81 = vmatprep.subr.mxu0 0.0
    %82 = vmatpush1.msra.mxu0 0.0
    %83 = vmatprep.subr.mxu0 0.0
    %84 = vmatpush1.msra.mxu0 0.0
    %85 = vmatprep.subr.mxu0 0.0
    %86 = vmatpush1.msra.mxu0 0.0
    %87 = vmatprep.subr.mxu0 0.0
    %88 = vmatpush1.msra.mxu0 0.0
    %89 = vmatprep.subr.mxu0 0.0
    %90 = vmatpush1.msra.mxu0 0.0
    %91 = vmatprep.subr.mxu0 0.0
    %92 = vmatpush1.msra.mxu0 0.0
    %93 = vmatprep.subr.mxu0 0.0
    %94 = vmatpush1.msra.mxu0 0.0
    %95 = vmatprep.subr.mxu0 0.0
    %96 = vmatpush1.msra.mxu0 0.0
    %97 = vmatprep.subr.mxu0 0.0
    %98 = vmatpush1.msra.mxu0 0.0
    %99 = vmatprep.subr.mxu0 0.0
    %100 = vmatpush1.msra.mxu0 0.0
    %101 = vmatprep.subr.mxu0 0.0
    %102 = vmatpush1.msra.mxu0 0.0
    %103 = vmatprep.subr.mxu0 0.0
    %104 = vmatpush1.msra.mxu0 0.0
    %105 = vmatprep.subr.mxu0 0.0
    %106 = vmatpush1.msra.mxu0 0.0
    %107 = vmatprep.subr.mxu0 0.0
    %108 = vmatpush1.msra.mxu0 0.0
    %109 = vmatprep.subr.mxu0 0.0
    %110 = vmatpush1.msra.mxu0 0.0
    %111 = vmatprep.subr.mxu0 0.0
    %112 = vmatpush1.msra.mxu0 0.0
    %113 = vmatprep.subr.mxu0 0.0
    %114 = vmatpush1.msra.mxu0 0.0
    %115 = vmatprep.subr.mxu0 0.0
    %116 = vmatpush1.msra.mxu0 0.0
    %117 = vmatprep.subr.mxu0 0.0
    %118 = vmatpush1.msra.mxu0 0.0
    %119 = vmatprep.subr.mxu0 0.0
    %120 = vmatpush1.msra.mxu0 0.0
    %121 = vmatprep.subr.mxu0 0.0
    %122 = vmatpush1.msra.mxu0 0.0
    %123 = vmatprep.subr.mxu0 0.0
    %124 = vmatpush1.msra.mxu0 0.0
    %125 = vmatprep.mubr.f32.mxu0 0.0
    %126 = vmatmul.mubr.f32.gmra.mrb[0].mxu0 %v50
    %v127 = vpop.f32.mrb[0].mxu0
    %v128 = vadd.f32 0.0, %v127
    %v129 = vpop.f32.mrb[0].mxu0
    %130 = vmatprep.mubr.f32.mxu0 0.0
    %131 = vmatmul.mubr.f32.gmra.mrb[0].mxu0 %v53
    %v132 = vpop.f32.mrb[0].mxu0
    %v133 = vadd.f32 0.0, %v132
    %v134 = vpop.f32.mrb[0].mxu0
    %135 = vmatprep.mubr.f32.mxu0 0.0
    %136 = vmatmul.mubr.f32.gmra.mrb[0].mxu0 %v56
    %v137 = vpop.f32.mrb[0].mxu0
    %v138 = vadd.f32 0.0, %v137
    %v139 = vpop.f32.mrb[0].mxu0
    %140 = vmatprep.mubr.f32.mxu0 0.0
    %141 = vmatmul.mubr.f32.gmra.mrb[0].mxu0 %v59
    %v142 = vpop.f32.mrb[0].mxu0
    %v143 = vadd.f32 0.0, %v142
    %v144 = vpop.f32.mrb[0].mxu0
    %145 = vdwg.mxu0
    %146 = vst [vmem:[#allocation7] sm:$0xff] %v128
    %147 = vst [vmem:[#allocation7 + $0x8] sm:$0xff] %v133
    %148 = vst [vmem:[#allocation7 + $0x10] sm:$0xff] %v138
    %149 = vst [vmem:[#allocation7 + $0x18] sm:$0xff] %v143
    // Predicated region
    $region18: #{tpu_custom_call.1} parent=1 // pred_check
      _
    $region19: #{tpu_custom_call.1} parent=1 // pred_check_branch
      %151 = sbr.rel (0) target = $region21
    $region20: #{tpu_custom_call.1} parent=1 // pred_region
      %s153 = ssub.s32 512, 512
      %154 = vsyncadd [#allocation4], %s153
      %s155 = sshll.u32 [#allocation7], 4
      %s156 = int_to_ptr.vmem [resolvable:$true] %s155
      %161 = dma.vmem_to_hbm [thread:$0]  %s156, 512, %s2, [#allocation4], 128, 128, 8
    $region21: #{tpu_custom_call.1} parent=1 // pred_fallthru
      _
    // Predicated region
    $region22: #{tpu_custom_call.1} parent=1 // pred_check
      _
    $region23: #{tpu_custom_call.1} parent=1 // pred_check_branch
      %163 = sbr.rel (0) target = $region25
    $region24: #{tpu_custom_call.1} parent=1 // pred_region
      %164 = dma.done [#allocation4], 512
    $region25: #{tpu_custom_call.1} parent=1 // pred_fallthru
      _
    %165 = vsyncpa [#allocation3], 1
    %166 = vsyncpa [#allocation6], 1
    %167 = vsyncpa [#allocation4], 1

</llo_original>
